<compile_context>
chip_gen: v5e
topology: v5e:2x2
jax: 0.10.0
libtpu: 0.0.40
codegen_flags: <defaults>
</compile_context>

<pallas_src>
import jax
import jax.numpy as jnp
from jax.experimental import pallas as pl
from jax.experimental.pallas import tpu as pltpu


def _round_up(x, m):
    return ((x + m - 1) // m) * m


def _sublane_multiple(dtype):
    itemsize = jnp.dtype(dtype).itemsize
    if itemsize >= 4:
        return 8
    if itemsize == 2:
        return 16
    return 32


def _pick_lane_tile(dim, pref):
    """Largest multiple of 128 <= pref that divides dim; else the full dim."""
    if dim <= pref or dim % 128 != 0:
        return dim
    t = (pref // 128) * 128
    while t >= 128:
        if dim % t == 0:
            return t
        t -= 128
    return dim


def _projector_kernel(x_ref, w_ref, b_ref, o_ref):
    # x_ref: (tm, D_in), w_ref: (D_in, tn), b_ref: (1, tn) f32, o_ref: (tm, tn)
    acc = jnp.dot(x_ref[...], w_ref[...], preferred_element_type=jnp.float32)
    o_ref[...] = (acc + b_ref[...]).astype(o_ref.dtype)


def paligemma_multimodal_projector(image_features, weight_t, bias_f32, *,
                                   tm=512, out_dtype=None,
                                   resident_weight_budget=40 << 20):
    """Projector forward.

    image_features: [B, S, D_in]
    weight_t:       [D_in, D_out]  -- nn.Linear weight pre-transposed ONCE at
                                      model init, already in the compute dtype
                                      (f32 or bf16).
    bias_f32:       [D_out]        -- bias pre-cast to f32 ONCE at model init.
    out_dtype:      output dtype (defaults to image_features.dtype); pass
                    jnp.bfloat16 when the downstream Gemma stack runs bf16.
    """
    B, S, D_in = image_features.shape
    D_in_w, D_out = weight_t.shape
    assert D_in_w == D_in, "weight_t must be [D_in, D_out]"
    if out_dtype is None:
        out_dtype = image_features.dtype
    compute_dtype = weight_t.dtype
    M = B * S

    itemsize = jnp.dtype(compute_dtype).itemsize
    out_itemsize = jnp.dtype(out_dtype).itemsize
    sub = _sublane_multiple(compute_dtype)

    # ---- M tiling --------------------------------------------------------
    tm = max(sub, min(_round_up(tm, sub), _round_up(M, sub)))
    # v7x shards "parallel" grid axes over its 2 TensorCores: try to give the
    # grid at least 2 blocks (no-op on single-TC v5e/v6e).
    if _round_up(M, tm) // tm < 2:
        tm_half = _round_up(pl.cdiv(M, 2), sub)
        if sub <= tm_half < tm:
            tm = tm_half
    M_pad = _round_up(M, tm)

    # ---- per-call operand prep (activations only; weight/bias pre-prepped) --
    x2d = image_features.reshape(M, D_in)
    if x2d.dtype != compute_dtype:
        x2d = x2d.astype(compute_dtype)
    if M_pad != M:
        x2d = jnp.pad(x2d, ((0, M_pad - M), (0, 0)))
    b2d = bias_f32.reshape(1, D_out).astype(jnp.float32)

    w_bytes = D_in * D_out * itemsize
    x_tile_bytes = tm * D_in * itemsize
    bias_bytes = D_out * 4

    resident = (w_bytes + 2 * x_tile_bytes + 2 * tm * D_out * out_itemsize
                + bias_bytes) <= resident_weight_budget

    if resident:
        # Weight (and bias) fully VMEM-resident: constant block index +
        # single pipeline buffer -> one HBM read of W per forward.
        tn = D_out
        grid = (M_pad // tm,)
        in_specs = [
            pl.BlockSpec((tm, D_in), lambda i: (i, 0)),
            pl.BlockSpec((D_in, D_out), lambda i: (0, 0),
                         pipeline_mode=pl.Buffered(1)),
            pl.BlockSpec((1, D_out), lambda i: (0, 0),
                         pipeline_mode=pl.Buffered(1)),
        ]
        out_specs = pl.BlockSpec((tm, D_out), lambda i: (i, 0))
        dims = ("parallel",)
        x_reads, w_reads = 1, 1
        w_bufs, b_bufs = 1, 1
    else:
        # Streaming fallback: tile D_out, M innermost so the weight block
        # index is constant along the fastest axis (W still read once total,
        # x re-read D_out/tn times).
        tn = _pick_lane_tile(D_out, 512)
        grid = (D_out // tn, M_pad // tm)
        in_specs = [
            pl.BlockSpec((tm, D_in), lambda j, i: (i, 0)),
            pl.BlockSpec((D_in, tn), lambda j, i: (0, j)),
            pl.BlockSpec((1, tn), lambda j, i: (0, j)),
        ]
        out_specs = pl.BlockSpec((tm, tn), lambda j, i: (i, j))
        dims = ("parallel", "parallel")
        x_reads, w_reads = D_out // tn, 1
        w_bufs, b_bufs = 2, 2

    # ---- VMEM budget & advisory cost --------------------------------------
    vmem_needed = (w_bufs * D_in * tn * itemsize
                   + 2 * x_tile_bytes
                   + 2 * tm * tn * out_itemsize
                   + b_bufs * tn * 4)
    vmem_limit = int(min(max(int(vmem_needed * 1.3) + (2 << 20), 32 << 20),
                         64 << 20))

    cost = pl.CostEstimate(
        flops=2 * M_pad * D_in * D_out,
        transcendentals=0,
        bytes_accessed=(x_reads * M_pad * D_in * itemsize
                        + w_reads * w_bytes
                        + bias_bytes
                        + M_pad * D_out * out_itemsize),
    )

    out2d = pl.pallas_call(
        _projector_kernel,
        out_shape=jax.ShapeDtypeStruct((M_pad, D_out), out_dtype),
        grid_spec=pltpu.PrefetchScalarGridSpec(
            num_scalar_prefetch=0,
            grid=grid,
            in_specs=in_specs,
            out_specs=out_specs,
        ),
        compiler_params=pltpu.CompilerParams(
            dimension_semantics=dims,
            vmem_limit_bytes=vmem_limit,
        ),
        cost_estimate=cost,
    )(x2d, weight_t, b2d)

    if M_pad != M:
        out2d = out2d[:M]
    return out2d.reshape(B, S, D_out)


if __name__ == "__main__":
    # Synthetic config: teacher_embedding_dim=32, projection_dim=64
    B, S = 2, 8
    D_in, D_out = 32, 64

    key = jax.random.PRNGKey(0)
    k_x, k_w, k_b = jax.random.split(key, 3)

    image_features = jax.random.normal(k_x, (B, S, D_in), dtype=jnp.float32)
    # nn.Linear weight layout: [out_features, in_features]; bias: [out_features]
    weight = jax.random.normal(k_w, (D_out, D_in), dtype=jnp.float32) * 0.02
    bias = jax.random.normal(k_b, (D_out,), dtype=jnp.float32) * 0.02

    # ---- one-time "model init" prep (NOT in the per-forward path) ----------
    weight_t_f32 = jnp.asarray(weight.T)                  # [D_in, D_out]
    weight_t_bf16 = weight_t_f32.astype(jnp.bfloat16)     # pre-cast once
    bias_f32 = bias.astype(jnp.float32)

    ref = image_features @ weight.T + bias

    # f32 path (exact match to the PyTorch reference).
    out = paligemma_multimodal_projector(image_features, weight_t_f32, bias_f32)
    out = jax.block_until_ready(out)
    assert out.shape == (B, S, D_out)
    assert jnp.allclose(out, ref, atol=1e-5, rtol=1e-5)

    # bf16 operands + bf16 output fast path (f32 accumulation on the MXU):
    # halves HBM traffic and doubles MXU throughput at real PaliGemma shapes.
    out_bf16 = paligemma_multimodal_projector(
        image_features.astype(jnp.bfloat16), weight_t_bf16, bias_f32,
        out_dtype=jnp.bfloat16)
    out_bf16 = jax.block_until_ready(out_bf16)
    assert out_bf16.shape == (B, S, D_out)
    assert jnp.allclose(out_bf16.astype(jnp.float32), ref, atol=3e-2, rtol=3e-2)

    print("KERNEL_OK")
</pallas_src>

<mosaic_0001>
module attributes {stable_mosaic.version = 11 : i64} {
  func.func @_projector_kernel(%arg0: i32, %arg1: memref<8x32xf32, #tpu.memory_space<vmem>>, %arg2: memref<32x64xf32, #tpu.memory_space<vmem>>, %arg3: memref<1x64xf32, #tpu.memory_space<vmem>>, %arg4: memref<8x64xf32, #tpu.memory_space<vmem>>) attributes {dimension_semantics = [#tpu.dimension_semantics<parallel>], iteration_bounds = array<i64: 2>, scalar_prefetch = 0 : i64, scratch_operands = 0 : i64, tpu.core_type = #tpu.core_type<tc>, window_params = [{transform_indices = @transform_0, window_bounds = array<i64: 8, 32>}, {pipeline_mode = #tpu.pipeline_mode<synchronous>, transform_indices = @transform_1, window_bounds = array<i64: 32, 64>}, {pipeline_mode = #tpu.pipeline_mode<synchronous>, transform_indices = @transform_2, window_bounds = array<i64: 1, 64>}, {transform_indices = @transform_3, window_bounds = array<i64: 8, 64>}]} {
    %c0 = arith.constant 0 : index
    %c0_0 = arith.constant 0 : index
    %0 = vector.load %arg1[%c0, %c0_0] : memref<8x32xf32, #tpu.memory_space<vmem>>, vector<8x32xf32>
    %c0_1 = arith.constant 0 : index
    %c0_2 = arith.constant 0 : index
    %1 = vector.load %arg2[%c0_1, %c0_2] : memref<32x64xf32, #tpu.memory_space<vmem>>, vector<32x64xf32>
    %cst = arith.constant dense<0.000000e+00> : vector<8x64xf32>
    %2 = tpu.matmul %0, %1, %cst {dimension_numbers = #tpu.dot_dimension_numbers<[1], [0], [0], [1], [0, 0, 1, 1], [], []>} : vector<8x32xf32>, vector<32x64xf32>, vector<8x64xf32> -> vector<8x64xf32>
    %c0_3 = arith.constant 0 : index
    %c0_4 = arith.constant 0 : index
    %3 = vector.load %arg3[%c0_3, %c0_4] : memref<1x64xf32, #tpu.memory_space<vmem>>, vector<1x64xf32>
    %4 = vector.broadcast %3 : vector<1x64xf32> to vector<8x64xf32>
    %5 = arith.addf %2, %4 : vector<8x64xf32>
    %c0_5 = arith.constant 0 : index
    %c0_6 = arith.constant 0 : index
    %6 = vector.load %arg4[%c0_5, %c0_6] : memref<8x64xf32, #tpu.memory_space<vmem>>, vector<8x64xf32>
    tpu.vector_store %arg4[%c0_5, %c0_6], %5 {strides = array<i32>} : memref<8x64xf32, #tpu.memory_space<vmem>>, vector<8x64xf32>,
    return
  }
  func.func @transform_0(%arg0: i32) -> (i32, i32) {
    %c0_i32 = arith.constant 0 : i32
    %c0_i32_0 = arith.constant 0 : i32
    return %arg0, %c0_i32 : i32, i32
  }
  func.func @transform_1(%arg0: i32) -> (i32, i32) {
    %c0_i32 = arith.constant 0 : i32
    %c0_i32_0 = arith.constant 0 : i32
    %c0_i32_1 = arith.constant 0 : i32
    return %c0_i32, %c0_i32_0 : i32, i32
  }
  func.func @transform_2(%arg0: i32) -> (i32, i32) {
    %c0_i32 = arith.constant 0 : i32
    %c0_i32_0 = arith.constant 0 : i32
    %c0_i32_1 = arith.constant 0 : i32
    return %c0_i32, %c0_i32_0 : i32, i32
  }
  func.func @transform_3(%arg0: i32) -> (i32, i32) {
    %c0_i32 = arith.constant 0 : i32
    %c0_i32_0 = arith.constant 0 : i32
    return %arg0, %c0_i32 : i32, i32
  }
}

</mosaic_0001>

<llo_original>
// kernel: tpu_custom_call.1
$region0: #{tpu_custom_call.1}
  #allocation0 [shape = 'u32[]', space=smem, size = 0x4, offset = 0x4, fixed_abs, tag = 'smem constant byte address 0x4 - core index']
  #allocation1 [shape = 'u32[72,128]{1,0:T(1,128)}', space=vmem, size = 0x9000, scoped, tag = 'internal scratch']
  %s0 = inlined_call_operand.hbm [shape: f32[16,32], index: 0, kind: input, shape index: {}]
  %s1 = inlined_call_operand.hbm [shape: f32[32,64], index: 1, kind: input, shape index: {}]
  %s2 = inlined_call_operand.vmem [shape: f32[1,64], index: 2, kind: input, shape index: {}]
  %s3 = inlined_call_operand.hbm [shape: f32[16,64], index: 3, kind: output, shape index: {}]
  %s4 = sld [smem:[#allocation0]]
  $region53: #{tpu_custom_call.1} parent=0
    _
  %s6 = ssub.s32 1, %s4
  %s7 = scalar_select 0, %s6, %s4
  $region1: #{tpu_custom_call.1} parent=0
    #allocation2 [shape = 'u8[8192]{0}', space=vmem, size = 0x2000, scoped, tag = 'input window, operand 0']
    #allocation3 [shape = 's32[2]{0}', space=sflag, size = 0x8, scoped, tag = 'scoped memory for tpu_custom_call.1']
    #allocation4 [shape = 's32[2]{0}', space=sflag, size = 0x8, scoped, tag = 'scoped memory for tpu_custom_call.1']
    #allocation5 [shape = 'u8[16384]{0}', space=vmem, size = 0x4000, scoped, tag = 'input window, operand 1, single buffered']
    #allocation6 [shape = 's32[1]{0}', space=sflag, size = 0x4, scoped, tag = 'scoped memory for tpu_custom_call.1']
    #allocation7 [shape = 'u8[8192]{0}', space=vmem, size = 0x2000, scoped, tag = 'output window, operand 0']
    %8 = vsyncpa [#allocation3], 0
    %s9 = scalar_lea.sflag [#allocation3], 1
    %10 = vsyncpa %s9, 0
    %11 = vsyncpa [#allocation6], 0
    %12 = vsyncpa [#allocation4], 0
    %s13 = scalar_lea.sflag [#allocation4], 1
    %14 = vsyncpa %s13, 0
    loop: start=0, step=1, limit=4
    $region2: #{tpu_custom_call.1} parent=1 // loop_pre_header
      _
    $region3: #{tpu_custom_call.1} parent=1 // loop_header
      %s16 = sphi 0, %s20
      %p17 = scmp.ge.s32.totalorder %s16, 4
      %s26 = sphi 0, %s28
      %s29 = sphi 0, %s26
      %s30 = sphi 0, %s29
      %s46 = sphi 0, %s30
      %s50 = sphi 0, %s50
      %s52 = sphi 0, %s50
      %s53 = sphi 0, %s52
      %s67 = sphi 0, %s53
      %s71 = sphi 0, %s71
      %s73 = sphi 0, %s71
      %s74 = sphi 0, %s73
      %s88 = sphi 0, %s74
      %s94 = sphi 0, %s96
      %s97 = sphi 0, %s94
      %s98 = sphi 0, %s97
      %s114 = sphi 0, %s98
    $region4: #{tpu_custom_call.1} parent=1 // loop_header_branch
      %19 = sbr.rel (%p17) target = $region8
    $region5: #{tpu_custom_call.1} parent=1 // loop_body
      %s21 = ssub.s32 %s16, 1
      %s22 = ssub.s32 %s16, 2
      %s23 = sadd.s32 %s16, 1
      %s24 = ssub.s32 %s16, %s23
      %p25 = scmp.eq.s32.totalorder %s24, 0
      %s27 = sadd.s32 %s26, 1
      %s28 = scalar_select %p25, %s26, %s27
      %p31 = pneg %p25
      %p32 = scmp.eq.s32.totalorder %s16, 1
      %p33 = por %p31, %p32
      %p34 = scmp.ne.s32.totalorder %s26, %s29
      %p35 = scmp.eq.s32.totalorder %s16, 0
      %p36 = por %p34, %p35
      %p37 = scmp.ne.s32.totalorder %s26, %s29
      %p38 = scmp.eq.s32.totalorder %s21, 1
      %p39 = por %p37, %p38
      %p40 = scmp.ne.s32.totalorder %s29, %s30
      %p41 = scmp.eq.s32.totalorder %s21, 0
      %p42 = por %p40, %p41
      %p43 = scmp.ne.s32.totalorder %s29, %s30
      %p44 = scmp.eq.s32.totalorder %s22, 1
      %p45 = por %p43, %p44
      %p47 = scmp.ne.s32.totalorder %s30, %s46
      %p48 = scmp.eq.s32.totalorder %s22, 0
      %p49 = por %p47, %p48
      %s51 = sadd.s32 %s50, 1
      %p54 = scmp.eq.s32.totalorder %s16, 1
      %p55 = scmp.ne.s32.totalorder %s50, %s52
      %p56 = scmp.eq.s32.totalorder %s16, 0
      %p57 = por %p55, %p56
      %p58 = scmp.ne.s32.totalorder %s50, %s52
      %p59 = scmp.eq.s32.totalorder %s21, 1
      %p60 = por %p58, %p59
      %p61 = scmp.ne.s32.totalorder %s52, %s53
      %p62 = scmp.eq.s32.totalorder %s21, 0
      %p63 = por %p61, %p62
      %p64 = scmp.ne.s32.totalorder %s52, %s53
      %p65 = scmp.eq.s32.totalorder %s22, 1
      %p66 = por %p64, %p65
      %p68 = scmp.ne.s32.totalorder %s53, %s67
      %p69 = scmp.eq.s32.totalorder %s22, 0
      %p70 = por %p68, %p69
      %s72 = sadd.s32 %s71, 1
      %p75 = scmp.eq.s32.totalorder %s16, 1
      %p76 = scmp.ne.s32.totalorder %s71, %s73
      %p77 = scmp.eq.s32.totalorder %s16, 0
      %p78 = por %p76, %p77
      %p79 = scmp.ne.s32.totalorder %s71, %s73
      %p80 = scmp.eq.s32.totalorder %s21, 1
      %p81 = por %p79, %p80
      %p82 = scmp.ne.s32.totalorder %s73, %s74
      %p83 = scmp.eq.s32.totalorder %s21, 0
      %p84 = por %p82, %p83
      %p85 = scmp.ne.s32.totalorder %s73, %s74
      %p86 = scmp.eq.s32.totalorder %s22, 1
      %p87 = por %p85, %p86
      %p89 = scmp.ne.s32.totalorder %s74, %s88
      %p90 = scmp.eq.s32.totalorder %s22, 0
      %p91 = por %p89, %p90
      %s92 = ssub.s32 %s16, %s23
      %p93 = scmp.eq.s32.totalorder %s92, 0
      %s95 = sadd.s32 %s94, 1
      %s96 = scalar_select %p93, %s94, %s95
      %p99 = pneg %p93
      %p100 = scmp.eq.s32.totalorder %s16, 1
      %p101 = por %p99, %p100
      %p102 = scmp.ne.s32.totalorder %s94, %s97
      %p103 = scmp.eq.s32.totalorder %s16, 0
      %p104 = por %p102, %p103
      %p105 = scmp.ne.s32.totalorder %s94, %s97
      %p106 = scmp.eq.s32.totalorder %s21, 1
      %p107 = por %p105, %p106
      %p108 = scmp.ne.s32.totalorder %s97, %s98
      %p109 = scmp.eq.s32.totalorder %s21, 0
      %p110 = por %p108, %p109
      %p111 = scmp.ne.s32.totalorder %s97, %s98
      %p112 = scmp.eq.s32.totalorder %s22, 1
      %p113 = por %p111, %p112
      %p115 = scmp.ne.s32.totalorder %s98, %s114
      %p116 = scmp.eq.s32.totalorder %s22, 0
      %p117 = por %p115, %p116
      %p118 = scmp.le.s32.totalorder 1, %s16
      %p119 = scmp.lt.s32.totalorder %s16, 3
      %p120 = pnand %p118, %p119
      %p121 = pneg %p120
      // Predicated region
      $region9: #{tpu_custom_call.1} parent=5 // pred_check
        _
      $region10: #{tpu_custom_call.1} parent=5 // pred_check_branch
        %123 = sbr.rel (%p120) target = $region12
      $region11: #{tpu_custom_call.1} parent=5 // pred_region
        %s124 = ssub.s32 %s16, 1
        // Predicated region
        $region13: #{tpu_custom_call.1} parent=11 // pred_check
          %p125 = pneg %p63
        $region14: #{tpu_custom_call.1} parent=11 // pred_check_branch
          %127 = sbr.rel (%p125) target = $region16
        $region15: #{tpu_custom_call.1} parent=11 // pred_region
          %129 = vsyncadd [#allocation6], 0
          %s130 = sshll.u32 %s1, 4
          %s131 = int_to_ptr.hbm [resolvable:$true] %s130
          %s132 = sshll.u32 [#allocation5], 4
          %s133 = int_to_ptr.vmem [resolvable:$true] %s132
          %138 = dma.hbm_to_vmem [thread:$0]  %s131, 512, %s133, [#allocation6], 128, 128, 8
        $region16: #{tpu_custom_call.1} parent=11 // pred_fallthru
          _
        // Predicated region
        $region17: #{tpu_custom_call.1} parent=11 // pred_check
          %p139 = pneg %p84
        $region18: #{tpu_custom_call.1} parent=11 // pred_check_branch
          %141 = sbr.rel (%p139) target = $region20
        $region19: #{tpu_custom_call.1} parent=11 // pred_region
          _
        $region20: #{tpu_custom_call.1} parent=11 // pred_fallthru
          _
      $region12: #{tpu_custom_call.1} parent=5 // pred_fallthru
        _
      %p142 = scmp.lt.s32.totalorder %s16, 2
      // Predicated region
      $region21: #{tpu_custom_call.1} parent=5 // pred_check
        %p143 = pneg %p142
      $region22: #{tpu_custom_call.1} parent=5 // pred_check_branch
        %145 = sbr.rel (%p143) target = $region24
      $region23: #{tpu_custom_call.1} parent=5 // pred_region
        // Predicated region
        $region25: #{tpu_custom_call.1} parent=23 // pred_check
          %p146 = pneg %p36
        $region26: #{tpu_custom_call.1} parent=23 // pred_check_branch
          %148 = sbr.rel (%p146) target = $region28
        $region27: #{tpu_custom_call.1} parent=23 // pred_region
          %s149 = sand.u32 %s26, 1
          %s150 = scalar_lea.sflag [#allocation3], %s149
          %s151 = sand.u32 %s26, 1
          %s152 = smul.addr %s151, 8
          %s153 = scalar_lea.vmem [#allocation2], %s152
          %155 = vsyncadd %s150, 0
          %s156 = smul.addr %s16, 8
          %s157 = scalar_lea.hbm %s0, %s156
          %s159 = sshll.u32 %s157, 4
          %s160 = int_to_ptr.hbm [resolvable:$true] %s159
          %s161 = sshll.u32 %s153, 4
          %s162 = int_to_ptr.vmem [resolvable:$true] %s161
          %164 = dma.hbm_to_vmem [thread:$0]  %s160, 128, %s162, %s150
        $region28: #{tpu_custom_call.1} parent=23 // pred_fallthru
          _
      $region24: #{tpu_custom_call.1} parent=5 // pred_fallthru
        _
      %p165 = scmp.le.s32.totalorder 1, %s16
      %p166 = scmp.lt.s32.totalorder %s16, 3
      %p167 = pnand %p165, %p166
      %p168 = pneg %p167
      // Predicated region
      $region29: #{tpu_custom_call.1} parent=5 // pred_check
        _
      $region30: #{tpu_custom_call.1} parent=5 // pred_check_branch
        %170 = sbr.rel (%p167) target = $region32
      $region31: #{tpu_custom_call.1} parent=5 // pred_region
        %s171 = ssub.s32 %s16, 1
        %s172 = sand.u32 %s29, 1
        %s173 = scalar_lea.sflag [#allocation3], %s172
        %s174 = sand.u32 %s29, 1
        %s175 = smul.addr %s174, 8
        %s176 = scalar_lea.vmem [#allocation2], %s175
        // Predicated region
        $region33: #{tpu_custom_call.1} parent=31 // pred_check
          %p177 = pneg %p42
        $region34: #{tpu_custom_call.1} parent=31 // pred_check_branch
          %179 = sbr.rel (%p177) target = $region36
        $region35: #{tpu_custom_call.1} parent=31 // pred_region
          %181 = dma.done %s173, 128
        $region36: #{tpu_custom_call.1} parent=31 // pred_fallthru
          _
        // Predicated region
        $region37: #{tpu_custom_call.1} parent=31 // pred_check
          %p182 = pneg %p63
        $region38: #{tpu_custom_call.1} parent=31 // pred_check_branch
          %184 = sbr.rel (%p182) target = $region40
        $region39: #{tpu_custom_call.1} parent=31 // pred_region
          %186 = dma.done [#allocation6], 512
        $region40: #{tpu_custom_call.1} parent=31 // pred_fallthru
          _
        %s187 = sand.u32 %s29, 1
        %s188 = scalar_lea.sflag [#allocation3], %s187
        %s189 = sand.u32 %s29, 1
        %s190 = smul.addr %s189, 8
        %s191 = scalar_lea.vmem [#allocation2], %s190
        %p192 = pneg %p42
        %p193 = pneg %p39
        %p194 = pneg %p63
        %p195 = pneg %p60
        %p196 = pneg %p84
        %p197 = pneg %p81
        %p198 = pneg %p110
        %p199 = pneg %p107
        %s200 = sand.u32 %s97, 1
        %s201 = scalar_lea.sflag [#allocation4], %s200
        %s202 = sand.u32 %s97, 1
        %s203 = smul.addr %s202, 8
        %s204 = scalar_lea.vmem [#allocation7], %s203
        %v205 = vld [vmem:[%s176] sm:$0xff]
        %v206 = vld [vmem:[#allocation5] sm:$0xff]
        %v207 = vld [vmem:[#allocation5 + $0x8] sm:$0xff]
        %v208 = vld [vmem:[#allocation5 + $0x10] sm:$0xff]
        %v209 = vld [vmem:[#allocation5 + $0x18] sm:$0xff]
        %v210 = vld [vmem:[%s2] sm:$0x1]
        %v212 = vperm.slane %v210, 0
        %vm214 = vcmask 261120
        %v216 = vsel %vm214, %v205, 0
        %218 = vmatpush.msra.mxu0 0.0
        %219 = vmatpush.msra.mxu0 0.0
        %220 = vmatpush.msra.mxu0 0.0
        %221 = vmatpush.msra.mxu0 0.0
        %222 = vmatpush.msra.mxu0 0.0
        %223 = vmatpush.msra.mxu0 0.0
        %224 = vmatpush.msra.mxu0 0.0
        %225 = vmatpush.msra.mxu0 0.0
        %226 = vmatpush.msra.mxu0 0.0
        %227 = vmatpush.msra.mxu0 0.0
        %228 = vmatpush.msra.mxu0 0.0
        %229 = vmatpush.msra.mxu0 0.0
        %230 = vmatpush.msra.mxu0 %v209
        %231 = vmatpush.msra.mxu0 %v208
        %232 = vmatpush.msra.mxu0 %v207
        %233 = vmatpush.msra.mxu0 %v206
        %234 = vmatmul.f32.gmra.mxu0 %v216
        %v235 = vpop.f32.mrf.mxu0
        %v236 = vadd.f32 %v212, %v235
        %237 = vdwg.mxu0
        %vm238 = vcmask 523264
        %239 = vst.msk [vmem:[%s204] sm:$0xff] %vm238, %v236
        %s240 = sand.u32 %s97, 1
        %s241 = scalar_lea.sflag [#allocation4], %s240
        %s242 = sand.u32 %s97, 1
        %s243 = smul.addr %s242, 8
        %s244 = scalar_lea.vmem [#allocation7], %s243
        // Predicated region
        $region41: #{tpu_custom_call.1} parent=31 // pred_check
          %p245 = pneg %p107
        $region42: #{tpu_custom_call.1} parent=31 // pred_check_branch
          %247 = sbr.rel (%p245) target = $region44
        $region43: #{tpu_custom_call.1} parent=31 // pred_region
          %249 = vsyncadd %s241, 0
          %s250 = smul.addr %s21, 8
          %s251 = scalar_lea.hbm %s3, %s250
          %s253 = sshll.u32 %s244, 4
          %s254 = int_to_ptr.vmem [resolvable:$true] %s253
          %s255 = sshll.u32 %s251, 4
          %s256 = int_to_ptr.hbm [resolvable:$true] %s255
          %258 = dma.vmem_to_hbm [thread:$0]  %s254, 128, %s256, %s241
        $region44: #{tpu_custom_call.1} parent=31 // pred_fallthru
          _
      $region32: #{tpu_custom_call.1} parent=5 // pred_fallthru
        _
      %p259 = scmp.le.s32.totalorder 2, %s16
      // Predicated region
      $region45: #{tpu_custom_call.1} parent=5 // pred_check
        %p260 = pneg %p259
      $region46: #{tpu_custom_call.1} parent=5 // pred_check_branch
        %262 = sbr.rel (%p260) target = $region48
      $region47: #{tpu_custom_call.1} parent=5 // pred_region
        %s263 = ssub.s32 %s16, 2
        // Predicated region
        $region49: #{tpu_custom_call.1} parent=47 // pred_check
          %p264 = pneg %p113
        $region50: #{tpu_custom_call.1} parent=47 // pred_check_branch
          %266 = sbr.rel (%p264) target = $region52
        $region51: #{tpu_custom_call.1} parent=47 // pred_region
          %s267 = sand.u32 %s98, 1
          %s268 = scalar_lea.sflag [#allocation4], %s267
          %s269 = sand.u32 %s98, 1
          %s270 = smul.addr %s269, 8
          %s271 = scalar_lea.vmem [#allocation7], %s270
          %273 = dma.done %s268, 128
        $region52: #{tpu_custom_call.1} parent=47 // pred_fallthru
          _
      $region48: #{tpu_custom_call.1} parent=5 // pred_fallthru
        _
    $region6: #{tpu_custom_call.1} parent=1 // loop_footer
      %s20 = sadd.s32 1, %s16
    $region7: #{tpu_custom_call.1} parent=1 // loop_footer_branch
      %15 = sbr.rel target = $region3
    $region8: #{tpu_custom_call.1} parent=1 // loop_exit
      _
    %274 = vsyncpa [#allocation3], 1
    %s275 = scalar_lea.sflag [#allocation3], 1
    %276 = vsyncpa %s275, 1
    %277 = vsyncpa [#allocation6], 1
    %278 = vsyncpa [#allocation4], 1
    %s279 = scalar_lea.sflag [#allocation4], 1
    %280 = vsyncpa %s279, 1

</llo_original>
